<compile_context>
chip_gen: v6e
topology: v6e:2x2x1
jax: 0.10.0
libtpu: 0.0.40
codegen_flags: <defaults>
</compile_context>

<pallas_src>
import functools

import jax
import jax.numpy as jnp
from jax import lax
from jax.experimental import pallas as pl
from jax.experimental.pallas import tpu as pltpu

# ---- deterministic parameter init (module __init__ semantics) ----------------
TAU = 0.01                     # nn.Parameter(tau)
LAM = 0.03
SIGMA = 1.0 / (TAU * 8.0)      # nn.Parameter(sigma) = 12.5
THETA = 2.0                    # nn.Parameter(theta)
PROX_F_SIGMA = 1.0             # Prox_l1(sigma=1.0)
TAU_G = TAU * LAM              # Prox_l2_learnable(tau=tau*lam)
INV_ONE_PLUS_TAU_G = 1.0 / (1.0 + TAU_G)


def _vmem_limit_bytes():
    """Scoped-VMEM limit sized per generation (v7x 64 MiB phys, v5e/v6e 128)."""
    try:
        cap = pltpu.get_tpu_info().vmem_capacity_bytes
    except Exception:  # pragma: no cover - conservative fallback (v7x-sized)
        cap = 64 << 20
    return int(min(cap * 3 // 4, 96 << 20))


def _pick_batch_tile(n, hw_pad, num_iters, vmem_limit):
    """Batch-tile (block rows) selection.

    Budget counts the 9 double-buffered pipeline planes AND ~12 full-tile
    body temporaries (gx, gy, y1n/y2n, y1m/y2m, div, xkn, un, masks).  Caps
    the per-plane block near the mem-bound sweet spot (~1 MiB) — smaller when
    fused iterations make the kernel VALU-bound — and targets >= 8 grid steps
    so both v7x TensorCores get a real pipeline.
    """
    bytes_per_pixel = (9 * 2 + 12) * 4
    vmem_budget = max(vmem_limit - (4 << 20), 4 << 20)
    cap_vmem = vmem_budget // (bytes_per_pixel * hw_pad)
    per_plane = (1 << 20) if num_iters == 1 else (256 << 10)
    cap_sweet = per_plane // (4 * hw_pad)
    cap = max(1, min(cap_vmem, cap_sweet))
    bt = min(cap, max(8, pl.cdiv(n, 8)))        # aim for >= 8 grid steps
    if bt >= n:
        return n                                # whole batch, one grid step
    return max(8, (bt // 8) * 8)                # sublane-aligned block rows


def _cp_kernel(xk_ref, y_ref, u_ref, f_ref,
               xkn_ref, yn_ref, un_ref, *, w, hw, num_iters):
    """num_iters CP iterations on a (bt, hw_pad) lane-dense batch tile.

    y_ref / yn_ref are (bt, 2*hw_pad): [:, :hw_pad] is the x-component dual,
    [:, hw_pad:] the y-component (tile-aligned, zero-cost views).
    """
    bt, hw_pad = xk_ref.shape

    # Grid-invariant boundary predicates, broadcast once (JAX does not CSE
    # broadcast_in_dim, so keep the full-tile masks out of the iteration loop).
    k = lax.broadcasted_iota(jnp.int32, (1, hw_pad), 1)   # flat pixel index
    col = k % w                                            # j (position along W)
    in_x = jnp.broadcast_to(col < (w - 1), (bt, hw_pad))   # j <  W-1
    nz_x = jnp.broadcast_to(col > 0, (bt, hw_pad))         # j >  0
    in_y = jnp.broadcast_to(k < (hw - w), (bt, hw_pad))    # i <  H-1
    nz_y = jnp.broadcast_to(k >= w, (bt, hw_pad))          # i >  0

    # Loop-invariant prox_g term: (v + tau_g*f)/(1+tau_g) = v*INV + f_scaled.
    f_scaled = (TAU_G * INV_ONE_PLUS_TAU_G) * f_ref[...]

    def one_iter(carry):
        xk, y1, y2, u = carry

        # _gradient(u): forward differences, zero at the far boundary.
        # Rolls are per-row lane rotations (XLU slot); wrap-around positions
        # are masked off, so padded lanes never contaminate valid pixels.
        gx = jnp.where(in_x, pltpu.roll(u, shift=hw_pad - 1, axis=1) - u, 0.0)
        gy = jnp.where(in_y, pltpu.roll(u, shift=hw_pad - w, axis=1) - u, 0.0)

        # dual ascent + Prox_l1: projection onto l_inf ball of radius 1.
        y1n = jnp.clip(y1 + SIGMA * gx, -PROX_F_SIGMA, PROX_F_SIGMA)
        y2n = jnp.clip(y2 + SIGMA * gy, -PROX_F_SIGMA, PROX_F_SIGMA)

        # dis_divergence: negative adjoint of the forward-difference gradient,
        # written as two masked terms per component (no nested selects).
        y1m = pltpu.roll(y1n, shift=1, axis=1)        # y1n[k-1]
        y2m = pltpu.roll(y2n, shift=w, axis=1)        # y2n[k-W]
        div = (jnp.where(in_x, y1n, 0.0) - jnp.where(nz_x, y1m, 0.0)
               + jnp.where(in_y, y2n, 0.0) - jnp.where(nz_y, y2m, 0.0))

        # primal descent + Prox_l2_learnable against f, then extrapolation.
        xkn = (xk + TAU * div) * INV_ONE_PLUS_TAU_G + f_scaled
        un_new = xkn + THETA * (xkn - xk)
        return xkn, y1n, y2n, un_new

    carry = (xk_ref[...], y_ref[:, :hw_pad], y_ref[:, hw_pad:], u_ref[...])
    if num_iters == 1:
        carry = one_iter(carry)
    else:
        # TODO(synk): a stacked LCP network has per-block learnable params;
        # the fused path assumes identical params across iterations.
        carry = lax.fori_loop(0, num_iters, lambda _, c: one_iter(c), carry)

    xkn, y1n, y2n, un = carry
    xkn_ref[...] = xkn
    yn_ref[:, :hw_pad] = y1n
    yn_ref[:, hw_pad:] = y2n
    un_ref[...] = un


@functools.partial(jax.jit, static_argnames=("num_iters",))
def pycp_block(xk, yk, xbar, f, num_iters=1):
    """Pallas wrapper. Returns (xkn, ykn, _xkn, f) like the PyTorch module."""
    N, _, H, W = xk.shape
    HW = H * W
    HW_pad = ((HW + 127) // 128) * 128   # lane-dense (unmasked vst) block width

    # Layout plumbing: flatten each plane so the lane axis is HW_pad (>=128).
    # All reshapes below are contiguous -> free; padding only copies when
    # HW is not already a multiple of 128.
    xk2 = xk.reshape(N, HW)
    u2 = xbar.reshape(N, HW)
    f2 = f.reshape(N, HW)
    y2 = yk.reshape(N, 2 * HW)
    if HW_pad != HW:
        pad = HW_pad - HW
        xk2 = jnp.pad(xk2, ((0, 0), (0, pad)))
        u2 = jnp.pad(u2, ((0, 0), (0, pad)))
        f2 = jnp.pad(f2, ((0, 0), (0, pad)))
        y2 = jnp.pad(yk.reshape(N, 2, HW),
                     ((0, 0), (0, 0), (0, pad))).reshape(N, 2 * HW_pad)

    vmem_limit = _vmem_limit_bytes()
    bt = _pick_batch_tile(N, HW_pad, num_iters, vmem_limit)
    grid = (pl.cdiv(N, bt),)

    spec = pl.BlockSpec((bt, HW_pad), lambda i: (i, 0))
    yspec = pl.BlockSpec((bt, 2 * HW_pad), lambda i: (i, 0))

    cost = pl.CostEstimate(
        flops=30 * N * HW * num_iters,
        transcendentals=0,
        bytes_accessed=9 * N * HW_pad * 4,
    )

    kernel = functools.partial(_cp_kernel, w=W, hw=HW, num_iters=num_iters)

    xkn2, yn2, un2 = pl.pallas_call(
        kernel,
        out_shape=(
            jax.ShapeDtypeStruct((N, HW_pad), xk.dtype),
            jax.ShapeDtypeStruct((N, 2 * HW_pad), yk.dtype),
            jax.ShapeDtypeStruct((N, HW_pad), xbar.dtype),
        ),
        grid=grid,
        in_specs=[spec, yspec, spec, spec],
        out_specs=(spec, yspec, spec),
        compiler_params=pltpu.CompilerParams(
            dimension_semantics=("parallel",),
            vmem_limit_bytes=vmem_limit,
        ),
        cost_estimate=cost,
    )(xk2, y2, u2, f2)

    if HW_pad != HW:
        xkn = xkn2[:, :HW].reshape(N, 1, H, W)
        ykn = yn2.reshape(N, 2, HW_pad)[:, :, :HW].reshape(N, 2, H, W)
        xbarn = un2[:, :HW].reshape(N, 1, H, W)
    else:
        xkn = xkn2.reshape(N, 1, H, W)
        ykn = yn2.reshape(N, 2, H, W)
        xbarn = un2.reshape(N, 1, H, W)
    return xkn, ykn, xbarn, f


# ---- pure-JAX reference (same math, used only for a correctness check) -------
def _reference(xk, yk, xbar, f):
    u = xbar[:, 0]
    gx = jnp.zeros_like(u).at[:, :, :-1].set(u[:, :, 1:] - u[:, :, :-1])
    gy = jnp.zeros_like(u).at[:, :-1, :].set(u[:, 1:, :] - u[:, :-1, :])
    grad = jnp.stack([gx, gy], axis=1)
    ykn = jnp.clip(yk + SIGMA * grad, -PROX_F_SIGMA, PROX_F_SIGMA)

    p1, p2 = ykn[:, 0], ykn[:, 1]
    dx = jnp.concatenate(
        [p1[:, :, :1], p1[:, :, 1:-1] - p1[:, :, :-2], -p1[:, :, -2:-1]], axis=2)
    dy = jnp.concatenate(
        [p2[:, :1, :], p2[:, 1:-1, :] - p2[:, :-2, :], -p2[:, -2:-1, :]], axis=1)
    div = (dx + dy)[:, None]

    v = xk + TAU * div
    xkn = (v + TAU_G * f) / (1.0 + TAU_G)
    xbarn = xkn + THETA * (xkn - xk)
    return xkn, ykn, xbarn, f


if __name__ == "__main__":
    key = jax.random.PRNGKey(0)
    k1, k2, k3, k4 = jax.random.split(key, 4)
    N, H, W = 2, 16, 16
    xk = jax.random.normal(k1, (N, 1, H, W), jnp.float32)
    yk = jax.random.normal(k2, (N, 2, H, W), jnp.float32)
    xbar = jax.random.normal(k3, (N, 1, H, W), jnp.float32)
    f = jax.random.normal(k4, (N, 1, H, W), jnp.float32)

    out = pycp_block(xk, yk, xbar, f)
    jax.block_until_ready(out)

    ref = _reference(xk, yk, xbar, f)
    for a, b in zip(out, ref):
        assert jnp.allclose(a, b, atol=1e-5, rtol=1e-5), "mismatch vs reference"

    print("KERNEL_OK")
</pallas_src>

<mosaic_0001>
module attributes {stable_mosaic.version = 11 : i64} {
  func.func @_cp_kernel(%arg0: i32, %arg1: memref<2x256xf32, #tpu.memory_space<vmem>>, %arg2: memref<2x512xf32, #tpu.memory_space<vmem>>, %arg3: memref<2x256xf32, #tpu.memory_space<vmem>>, %arg4: memref<2x256xf32, #tpu.memory_space<vmem>>, %arg5: memref<2x256xf32, #tpu.memory_space<vmem>>, %arg6: memref<2x512xf32, #tpu.memory_space<vmem>>, %arg7: memref<2x256xf32, #tpu.memory_space<vmem>>) attributes {dimension_semantics = [#tpu.dimension_semantics<parallel>], iteration_bounds = array<i64: 1>, scalar_prefetch = 0 : i64, scratch_operands = 0 : i64, tpu.core_type = #tpu.core_type<tc>, window_params = [{transform_indices = @transform_0, window_bounds = array<i64: 2, 256>}, {transform_indices = @transform_1, window_bounds = array<i64: 2, 512>}, {transform_indices = @transform_2, window_bounds = array<i64: 2, 256>}, {transform_indices = @transform_3, window_bounds = array<i64: 2, 256>}, {transform_indices = @transform_4, window_bounds = array<i64: 2, 256>}, {transform_indices = @transform_5, window_bounds = array<i64: 2, 512>}, {transform_indices = @transform_6, window_bounds = array<i64: 2, 256>}]} {
    %0 = tpu.iota {dimensions = array<i32: 1>} : vector<1x256xi32>
    %c16_i32 = arith.constant 16 : i32
    %c0_i32 = arith.constant 0 : i32
    %1 = arith.cmpi eq, %c16_i32, %c0_i32 : i32
    %c1_i32 = arith.constant 1 : i32
    %2 = arith.select %1, %c1_i32, %c16_i32 : i32
    %3 = vector.broadcast %2 : i32 to vector<1x256xi32>
    %4 = arith.remsi %0, %3 : vector<1x256xi32>
    %c0_i32_0 = arith.constant 0 : i32
    %5 = vector.broadcast %c0_i32_0 : i32 to vector<1x256xi32>
    %6 = arith.cmpi ne, %4, %5 : vector<1x256xi32>
    %c0_i32_1 = arith.constant 0 : i32
    %7 = vector.broadcast %c0_i32_1 : i32 to vector<1x256xi32>
    %8 = arith.cmpi slt, %4, %7 : vector<1x256xi32>
    %c0_i32_2 = arith.constant 0 : i32
    %9 = arith.cmpi slt, %2, %c0_i32_2 : i32
    %10 = vector.broadcast %9 : i1 to vector<1x256xi1>
    %11 = vector.broadcast %10 : vector<1x256xi1> to vector<1x256xi1>
    %12 = arith.xori %8, %11 : vector<1x256xi1>
    %13 = arith.andi %12, %6 : vector<1x256xi1>
    %14 = vector.broadcast %2 : i32 to vector<1x256xi32>
    %15 = arith.addi %4, %14 : vector<1x256xi32>
    %16 = arith.select %13, %15, %4 : vector<1x256xi1>, vector<1x256xi32>
    %c15_i32 = arith.constant 15 : i32
    %17 = vector.broadcast %c15_i32 : i32 to vector<1x256xi32>
    %18 = arith.cmpi slt, %16, %17 : vector<1x256xi32>
    %19 = vector.shape_cast %18 : vector<1x256xi1> to vector<1x256xi1>
    %20 = vector.broadcast %19 : vector<1x256xi1> to vector<2x256xi1>
    %c0_i32_3 = arith.constant 0 : i32
    %21 = vector.broadcast %c0_i32_3 : i32 to vector<1x256xi32>
    %22 = arith.cmpi sgt, %16, %21 : vector<1x256xi32>
    %23 = vector.shape_cast %22 : vector<1x256xi1> to vector<1x256xi1>
    %24 = vector.broadcast %23 : vector<1x256xi1> to vector<2x256xi1>
    %c240_i32 = arith.constant 240 : i32
    %25 = vector.broadcast %c240_i32 : i32 to vector<1x256xi32>
    %26 = arith.cmpi slt, %0, %25 : vector<1x256xi32>
    %27 = vector.shape_cast %26 : vector<1x256xi1> to vector<1x256xi1>
    %28 = vector.broadcast %27 : vector<1x256xi1> to vector<2x256xi1>
    %c16_i32_4 = arith.constant 16 : i32
    %29 = vector.broadcast %c16_i32_4 : i32 to vector<1x256xi32>
    %30 = arith.cmpi sge, %0, %29 : vector<1x256xi32>
    %31 = vector.shape_cast %30 : vector<1x256xi1> to vector<1x256xi1>
    %32 = vector.broadcast %31 : vector<1x256xi1> to vector<2x256xi1>
    %c0 = arith.constant 0 : index
    %c0_5 = arith.constant 0 : index
    %33 = vector.load %arg4[%c0, %c0_5] : memref<2x256xf32, #tpu.memory_space<vmem>>, vector<2x256xf32>
    %cst = arith.constant 2.99910025E-4 : f32
    %34 = vector.broadcast %cst : f32 to vector<2x256xf32>
    %35 = arith.mulf %34, %33 : vector<2x256xf32>
    %c0_6 = arith.constant 0 : index
    %c0_7 = arith.constant 0 : index
    %36 = vector.load %arg1[%c0_6, %c0_7] : memref<2x256xf32, #tpu.memory_space<vmem>>, vector<2x256xf32>
    %c0_8 = arith.constant 0 : index
    %c0_9 = arith.constant 0 : index
    %37 = vector.load %arg2[%c0_8, %c0_9] : memref<2x512xf32, #tpu.memory_space<vmem>>, vector<2x256xf32>
    %c0_10 = arith.constant 0 : index
    %c256 = arith.constant 256 : index
    %38 = vector.load %arg2[%c0_10, %c256] : memref<2x512xf32, #tpu.memory_space<vmem>>, vector<2x256xf32>
    %c0_11 = arith.constant 0 : index
    %c0_12 = arith.constant 0 : index
    %39 = vector.load %arg3[%c0_11, %c0_12] : memref<2x256xf32, #tpu.memory_space<vmem>>, vector<2x256xf32>
    %c255_i32 = arith.constant 255 : i32
    %40 = tpu.dynamic_rotate %39 by %c255_i32 dim 1 : vector<2x256xf32>, i32 -> vector<2x256xf32>
    %41 = arith.subf %40, %39 : vector<2x256xf32>
    %cst_13 = arith.constant 0.000000e+00 : f32
    %42 = vector.broadcast %cst_13 : f32 to vector<2x256xf32>
    %43 = arith.select %20, %41, %42 : vector<2x256xi1>, vector<2x256xf32>
    %c240_i32_14 = arith.constant 240 : i32
    %44 = tpu.dynamic_rotate %39 by %c240_i32_14 dim 1 : vector<2x256xf32>, i32 -> vector<2x256xf32>
    %45 = arith.subf %44, %39 : vector<2x256xf32>
    %cst_15 = arith.constant 0.000000e+00 : f32
    %46 = vector.broadcast %cst_15 : f32 to vector<2x256xf32>
    %47 = arith.select %28, %45, %46 : vector<2x256xi1>, vector<2x256xf32>
    %cst_16 = arith.constant 1.250000e+01 : f32
    %48 = vector.broadcast %cst_16 : f32 to vector<2x256xf32>
    %49 = arith.mulf %48, %43 : vector<2x256xf32>
    %50 = arith.addf %37, %49 : vector<2x256xf32>
    %cst_17 = arith.constant -1.000000e+00 : f32
    %cst_18 = arith.constant 1.000000e+00 : f32
    %51 = vector.broadcast %cst_17 : f32 to vector<2x256xf32>
    %52 = arith.maximumf %51, %50 : vector<2x256xf32>
    %53 = vector.broadcast %cst_18 : f32 to vector<2x256xf32>
    %54 = arith.minimumf %53, %52 : vector<2x256xf32>
    %cst_19 = arith.constant 1.250000e+01 : f32
    %55 = vector.broadcast %cst_19 : f32 to vector<2x256xf32>
    %56 = arith.mulf %55, %47 : vector<2x256xf32>
    %57 = arith.addf %38, %56 : vector<2x256xf32>
    %cst_20 = arith.constant -1.000000e+00 : f32
    %cst_21 = arith.constant 1.000000e+00 : f32
    %58 = vector.broadcast %cst_20 : f32 to vector<2x256xf32>
    %59 = arith.maximumf %58, %57 : vector<2x256xf32>
    %60 = vector.broadcast %cst_21 : f32 to vector<2x256xf32>
    %61 = arith.minimumf %60, %59 : vector<2x256xf32>
    %c1_i32_22 = arith.constant 1 : i32
    %62 = tpu.dynamic_rotate %54 by %c1_i32_22 dim 1 : vector<2x256xf32>, i32 -> vector<2x256xf32>
    %c16_i32_23 = arith.constant 16 : i32
    %63 = tpu.dynamic_rotate %61 by %c16_i32_23 dim 1 : vector<2x256xf32>, i32 -> vector<2x256xf32>
    %cst_24 = arith.constant 0.000000e+00 : f32
    %64 = vector.broadcast %cst_24 : f32 to vector<2x256xf32>
    %65 = arith.select %20, %54, %64 : vector<2x256xi1>, vector<2x256xf32>
    %cst_25 = arith.constant 0.000000e+00 : f32
    %66 = vector.broadcast %cst_25 : f32 to vector<2x256xf32>
    %67 = arith.select %24, %62, %66 : vector<2x256xi1>, vector<2x256xf32>
    %68 = arith.subf %65, %67 : vector<2x256xf32>
    %cst_26 = arith.constant 0.000000e+00 : f32
    %69 = vector.broadcast %cst_26 : f32 to vector<2x256xf32>
    %70 = arith.select %28, %61, %69 : vector<2x256xi1>, vector<2x256xf32>
    %71 = arith.addf %68, %70 : vector<2x256xf32>
    %cst_27 = arith.constant 0.000000e+00 : f32
    %72 = vector.broadcast %cst_27 : f32 to vector<2x256xf32>
    %73 = arith.select %32, %63, %72 : vector<2x256xi1>, vector<2x256xf32>
    %74 = arith.subf %71, %73 : vector<2x256xf32>
    %cst_28 = arith.constant 0.00999999977 : f32
    %75 = vector.broadcast %cst_28 : f32 to vector<2x256xf32>
    %76 = arith.mulf %75, %74 : vector<2x256xf32>
    %77 = arith.addf %36, %76 : vector<2x256xf32>
    %cst_29 = arith.constant 0.999700069 : f32
    %78 = vector.broadcast %cst_29 : f32 to vector<2x256xf32>
    %79 = arith.mulf %77, %78 : vector<2x256xf32>
    %80 = arith.addf %79, %35 : vector<2x256xf32>
    %81 = arith.subf %80, %36 : vector<2x256xf32>
    %cst_30 = arith.constant 2.000000e+00 : f32
    %82 = vector.broadcast %cst_30 : f32 to vector<2x256xf32>
    %83 = arith.mulf %82, %81 : vector<2x256xf32>
    %84 = arith.addf %80, %83 : vector<2x256xf32>
    %c0_31 = arith.constant 0 : index
    %c0_32 = arith.constant 0 : index
    %85 = vector.load %arg5[%c0_31, %c0_32] : memref<2x256xf32, #tpu.memory_space<vmem>>, vector<2x256xf32>
    tpu.vector_store %arg5[%c0_31, %c0_32], %80 {strides = array<i32>} : memref<2x256xf32, #tpu.memory_space<vmem>>, vector<2x256xf32>,
    %c0_33 = arith.constant 0 : index
    %c0_34 = arith.constant 0 : index
    %86 = vector.load %arg6[%c0_33, %c0_34] : memref<2x512xf32, #tpu.memory_space<vmem>>, vector<2x256xf32>
    tpu.vector_store %arg6[%c0_33, %c0_34], %54 {strides = array<i32>} : memref<2x512xf32, #tpu.memory_space<vmem>>, vector<2x256xf32>,
    %c0_35 = arith.constant 0 : index
    %c256_36 = arith.constant 256 : index
    %87 = vector.load %arg6[%c0_35, %c256_36] : memref<2x512xf32, #tpu.memory_space<vmem>>, vector<2x256xf32>
    tpu.vector_store %arg6[%c0_35, %c256_36], %61 {strides = array<i32>} : memref<2x512xf32, #tpu.memory_space<vmem>>, vector<2x256xf32>,
    %c0_37 = arith.constant 0 : index
    %c0_38 = arith.constant 0 : index
    %88 = vector.load %arg7[%c0_37, %c0_38] : memref<2x256xf32, #tpu.memory_space<vmem>>, vector<2x256xf32>
    tpu.vector_store %arg7[%c0_37, %c0_38], %84 {strides = array<i32>} : memref<2x256xf32, #tpu.memory_space<vmem>>, vector<2x256xf32>,
    return
  }
  func.func @transform_0(%arg0: i32) -> (i32, i32) {
    %c0_i32 = arith.constant 0 : i32
    %c0_i32_0 = arith.constant 0 : i32
    return %arg0, %c0_i32 : i32, i32
  }
  func.func @transform_1(%arg0: i32) -> (i32, i32) {
    %c0_i32 = arith.constant 0 : i32
    %c0_i32_0 = arith.constant 0 : i32
    return %arg0, %c0_i32 : i32, i32
  }
  func.func @transform_2(%arg0: i32) -> (i32, i32) {
    %c0_i32 = arith.constant 0 : i32
    %c0_i32_0 = arith.constant 0 : i32
    return %arg0, %c0_i32 : i32, i32
  }
  func.func @transform_3(%arg0: i32) -> (i32, i32) {
    %c0_i32 = arith.constant 0 : i32
    %c0_i32_0 = arith.constant 0 : i32
    return %arg0, %c0_i32 : i32, i32
  }
  func.func @transform_4(%arg0: i32) -> (i32, i32) {
    %c0_i32 = arith.constant 0 : i32
    %c0_i32_0 = arith.constant 0 : i32
    return %arg0, %c0_i32 : i32, i32
  }
  func.func @transform_5(%arg0: i32) -> (i32, i32) {
    %c0_i32 = arith.constant 0 : i32
    %c0_i32_0 = arith.constant 0 : i32
    return %arg0, %c0_i32 : i32, i32
  }
  func.func @transform_6(%arg0: i32) -> (i32, i32) {
    %c0_i32 = arith.constant 0 : i32
    %c0_i32_0 = arith.constant 0 : i32
    return %arg0, %c0_i32 : i32, i32
  }
}

</mosaic_0001>

<llo_original>
// kernel: pycp_block.1
$region0: #{pycp_block.1}
  #allocation0 [shape = 'u32[]', space=smem, size = 0x4, offset = 0x4, fixed_abs, tag = 'smem constant byte address 0x4 - core index']
  #allocation1 [shape = 'u32[144,128]{1,0:T(1,128)}', space=vmem, size = 0x12000, scoped, tag = 'internal scratch']
  %s0 = inlined_call_operand.vmem [shape: f32[2,256], index: 0, kind: input, shape index: {}]
  %s1 = inlined_call_operand.vmem [shape: f32[2,512], index: 1, kind: input, shape index: {}]
  %s2 = inlined_call_operand.vmem [shape: f32[2,256], index: 2, kind: input, shape index: {}]
  %s3 = inlined_call_operand.vmem [shape: f32[2,256], index: 3, kind: input, shape index: {}]
  %s4 = inlined_call_operand.vmem [shape: f32[2,256], index: 4, kind: output, shape index: {0}]
  %s5 = inlined_call_operand.vmem [shape: f32[2,512], index: 5, kind: output, shape index: {1}]
  %s6 = inlined_call_operand.vmem [shape: f32[2,256], index: 6, kind: output, shape index: {2}]
  %7 = xla_tuple %s4, %s5, %s6
  %s8 = sld [smem:[#allocation0]]
  $region42: #{pycp_block.1} parent=0
    _
  %s10 = ssub.s32 1, %s8
  %s11 = scalar_select 0, %s10, %s8
  // Predicated region
  $region2: #{pycp_block.1} parent=0 // pred_check
    _
  $region3: #{pycp_block.1} parent=0 // pred_check_branch
    %13 = sbr.rel (0) target = $region5
  $region4: #{pycp_block.1} parent=0 // pred_region
    _
  $region5: #{pycp_block.1} parent=0 // pred_fallthru
    _
  // Predicated region
  $region6: #{pycp_block.1} parent=0 // pred_check
    _
  $region7: #{pycp_block.1} parent=0 // pred_check_branch
    %15 = sbr.rel (0) target = $region9
  $region8: #{pycp_block.1} parent=0 // pred_region
    _
  $region9: #{pycp_block.1} parent=0 // pred_fallthru
    _
  // Predicated region
  $region10: #{pycp_block.1} parent=0 // pred_check
    _
  $region11: #{pycp_block.1} parent=0 // pred_check_branch
    %17 = sbr.rel (0) target = $region13
  $region12: #{pycp_block.1} parent=0 // pred_region
    _
  $region13: #{pycp_block.1} parent=0 // pred_fallthru
    _
  // Predicated region
  $region14: #{pycp_block.1} parent=0 // pred_check
    _
  $region15: #{pycp_block.1} parent=0 // pred_check_branch
    %19 = sbr.rel (0) target = $region17
  $region16: #{pycp_block.1} parent=0 // pred_region
    _
  $region17: #{pycp_block.1} parent=0 // pred_fallthru
    _
  %v20 = vlaneseq
  %v21 = vand.u32 %v20, 127
  %v22 = vadd.s32 %v21, 128
  %vm23 = vcmp.lt.s32.totalorder %v21, 0
  %v24 = vsub.s32 0, %v21
  %v25 = vsel %vm23, %v24, %v21
  %v26 = vshrl.u32 %v25, 4
  %v27 = vand.u32 %v25, 15
  %v28 = vsub.s32 0, %v27
  %v29 = vsel %vm23, %v28, %v27
  %vm30 = vcmp.lt.s32.totalorder %v22, 0
  %v31 = vsub.s32 0, %v22
  %v32 = vsel %vm30, %v31, %v22
  %v33 = vshrl.u32 %v32, 4
  %v34 = vand.u32 %v32, 15
  %v35 = vsub.s32 0, %v34
  %v36 = vsel %vm30, %v35, %v34
  %vm37 = vcmp.ne.s32.totalorder %v29, 0
  %vm38 = vcmp.ne.s32.totalorder %v36, 0
  %vm39 = vcmp.lt.s32.totalorder %v29, 0
  %vm40 = vcmp.lt.s32.totalorder %v36, 0
  %vm41 = vmand %vm39, %vm37
  %vm42 = vmand %vm40, %vm38
  %v43 = vadd.s32 %v29, 16
  %v44 = vadd.s32 %v36, 16
  %v45 = vsel %vm41, %v43, %v29
  %v46 = vsel %vm42, %v44, %v36
  %vm47 = vcmp.lt.s32.totalorder %v45, 15
  %vm48 = vcmp.lt.s32.totalorder %v46, 15
  %v49 = vsel %vm47, 1, 0
  %v50 = vsel %vm48, 1, 0
  %vm51 = vcmp.eq.s32.totalorder %v49, 1
  %vm52 = vcmp.eq.s32.totalorder %v50, 1
  %vm53 = vcmp.gt.s32.totalorder %v45, 0
  %vm54 = vcmp.gt.s32.totalorder %v46, 0
  %v55 = vsel %vm53, 1, 0
  %v56 = vsel %vm54, 1, 0
  %vm57 = vcmp.eq.s32.totalorder %v55, 1
  %vm58 = vcmp.eq.s32.totalorder %v56, 1
  %vm59 = vcmp.lt.s32.totalorder %v21, 240
  %vm60 = vcmp.lt.s32.totalorder %v22, 240
  %v61 = vsel %vm59, 1, 0
  %v62 = vsel %vm60, 1, 0
  %vm63 = vcmp.eq.s32.totalorder %v61, 1
  %vm64 = vcmp.eq.s32.totalorder %v62, 1
  %vm65 = vcmp.ge.s32.totalorder %v21, 16
  %vm66 = vcmp.ge.s32.totalorder %v22, 16
  %v67 = vsel %vm65, 1, 0
  %v68 = vsel %vm66, 1, 0
  %vm69 = vcmp.eq.s32.totalorder %v67, 1
  %vm70 = vcmp.eq.s32.totalorder %v68, 1
  %v71 = vld [vmem:[%s3] sm:$0xf]
  %v72 = vmul.f32 %v71, 0.00029991003
  %v73 = vld [vmem:[%s0] sm:$0xf]
  %v74 = vld [vmem:[%s1] sm:$0xf]
  %v75 = vld [vmem:[%s1 + $0x4] sm:$0xf]
  %v76 = vld [vmem:[%s2] sm:$0xf]
  %v79 = vunpack.c.l.s4 1983009808
  %v80 = vunpack.c.0.s8 %v79
  %v81 = vlaneseq
  %v82 = vshrl.u32 %v81, 7
  %v83 = vsub.s32 %v80, %v82
  %v84 = vrot.slane %v76, %v83
  %v85 = vcombine.high %v84, %v84
  %88 = vrot.lane.b32.xlu0 %v84, 127
  %v89 = vpop.permute.xlu0 %88
  %90 = vrot.lane.b32.xlu0 %v85, 127
  %v91 = vpop.permute.xlu0 %90
  %vm92 = vcmp.lt.s32.totalorder %v21, 127
  %v93 = vsel %vm92, %v89, %v91
  %v94 = vsel %vm92, %v91, %v89
  %v95 = vsub.f32 %v93, %v84
  %v96 = vsub.f32 %v94, %v85
  %v97 = vsel %vm51, %v95, 0.0
  %v98 = vsel %vm52, %v96, 0.0
  %99 = vrot.lane.b32.xlu0 %v84, 112
  %v100 = vpop.permute.xlu0 %99
  %101 = vrot.lane.b32.xlu0 %v85, 112
  %v102 = vpop.permute.xlu0 %101
  %vm103 = vcmp.lt.s32.totalorder %v21, 112
  %v104 = vsel %vm103, %v100, %v102
  %v105 = vsel %vm103, %v102, %v100
  %v106 = vsub.f32 %v104, %v84
  %v107 = vsub.f32 %v105, %v85
  %v108 = vsel %vm63, %v106, 0.0
  %v109 = vsel %vm64, %v107, 0.0
  %v110 = vmul.f32 %v97, 12.5
  %v111 = vmul.f32 %v98, 12.5
  %v114 = vcombine.low %v110, %v111
  %v116 = vunpack.c.l.s4 1983009808
  %v117 = vunpack.c.0.s8 %v116
  %v118 = vlaneseq
  %v119 = vshrl.u32 %v118, 7
  %v120 = vsub.s32 %v117, %v119
  %v121 = vrot.slane %v114, %v120
  %v123 = vadd.f32 %v74, %v121
  %v124 = vmax.f32 %v123, -1.0
  %v125 = vmin.f32 %v124, 1.0
  %v126 = vmul.f32 %v108, 12.5
  %v127 = vmul.f32 %v109, 12.5
  %v130 = vcombine.low %v126, %v127
  %v132 = vunpack.c.l.s4 1983009808
  %v133 = vunpack.c.0.s8 %v132
  %v134 = vlaneseq
  %v135 = vshrl.u32 %v134, 7
  %v136 = vsub.s32 %v133, %v135
  %v137 = vrot.slane %v130, %v136
  %v139 = vadd.f32 %v75, %v137
  %v140 = vmax.f32 %v139, -1.0
  %v141 = vmin.f32 %v140, 1.0
  %v144 = vunpack.c.l.s4 1983009808
  %v145 = vunpack.c.0.s8 %v144
  %v146 = vlaneseq
  %v147 = vshrl.u32 %v146, 7
  %v148 = vsub.s32 %v145, %v147
  %v149 = vrot.slane %v125, %v148
  %v150 = vcombine.high %v149, %v149
  %153 = vrot.lane.b32.xlu0 %v149, 1
  %v154 = vpop.permute.xlu0 %153
  %155 = vrot.lane.b32.xlu0 %v150, 1
  %v156 = vpop.permute.xlu0 %155
  %vm157 = vcmp.lt.s32.totalorder %v21, 1
  %v158 = vsel %vm157, %v154, %v156
  %v159 = vsel %vm157, %v156, %v154
  %v162 = vunpack.c.l.s4 1983009808
  %v163 = vunpack.c.0.s8 %v162
  %v164 = vlaneseq
  %v165 = vshrl.u32 %v164, 7
  %v166 = vsub.s32 %v163, %v165
  %v167 = vrot.slane %v141, %v166
  %v168 = vcombine.high %v167, %v167
  %171 = vrot.lane.b32.xlu0 %v167, 16
  %v172 = vpop.permute.xlu0 %171
  %173 = vrot.lane.b32.xlu0 %v168, 16
  %v174 = vpop.permute.xlu0 %173
  %vm175 = vcmp.lt.s32.totalorder %v21, 16
  %v176 = vsel %vm175, %v172, %v174
  %v177 = vsel %vm175, %v174, %v172
  %v178 = vsel %vm51, %v149, 0.0
  %v179 = vsel %vm52, %v150, 0.0
  %v180 = vsel %vm57, %v159, 0.0
  %v181 = vsel %vm58, %v158, 0.0
  %v182 = vsub.f32 %v178, %v180
  %v183 = vsub.f32 %v179, %v181
  %v184 = vsel %vm63, %v167, 0.0
  %v185 = vsel %vm64, %v168, 0.0
  %v186 = vadd.f32 %v182, %v184
  %v187 = vadd.f32 %v183, %v185
  %v188 = vsel %vm69, %v177, 0.0
  %v189 = vsel %vm70, %v176, 0.0
  %v190 = vsub.f32 %v186, %v188
  %v191 = vsub.f32 %v187, %v189
  %v192 = vmul.f32 %v190, 0.01
  %v193 = vmul.f32 %v191, 0.01
  %v196 = vcombine.low %v192, %v193
  %v198 = vunpack.c.l.s4 1983009808
  %v199 = vunpack.c.0.s8 %v198
  %v200 = vlaneseq
  %v201 = vshrl.u32 %v200, 7
  %v202 = vsub.s32 %v199, %v201
  %v203 = vrot.slane %v196, %v202
  %v205 = vadd.f32 %v73, %v203
  %v206 = vmul.f32 %v205, 0.99970007
  %v207 = vadd.f32 %v206, %v72
  %v208 = vsub.f32 %v207, %v73
  %v209 = vmul.f32 %v208, 2.0
  %v210 = vadd.f32 %v207, %v209
  %211 = vst [vmem:[%s4] sm:$0xf] %v207
  %212 = vst [vmem:[%s5] sm:$0xf] %v125
  %213 = vst [vmem:[%s5 + $0x4] sm:$0xf] %v141
  %214 = vst [vmem:[%s6] sm:$0xf] %v210
  // Predicated region
  $region18: #{pycp_block.1} parent=0 // pred_check
    _
  $region19: #{pycp_block.1} parent=0 // pred_check_branch
    %216 = sbr.rel (0) target = $region21
  $region20: #{pycp_block.1} parent=0 // pred_region
    _
  $region21: #{pycp_block.1} parent=0 // pred_fallthru
    _
  // Predicated region
  $region22: #{pycp_block.1} parent=0 // pred_check
    _
  $region23: #{pycp_block.1} parent=0 // pred_check_branch
    %218 = sbr.rel (0) target = $region25
  $region24: #{pycp_block.1} parent=0 // pred_region
    _
  $region25: #{pycp_block.1} parent=0 // pred_fallthru
    _
  // Predicated region
  $region26: #{pycp_block.1} parent=0 // pred_check
    _
  $region27: #{pycp_block.1} parent=0 // pred_check_branch
    %220 = sbr.rel (0) target = $region29
  $region28: #{pycp_block.1} parent=0 // pred_region
    _
  $region29: #{pycp_block.1} parent=0 // pred_fallthru
    _
  // Predicated region
  $region30: #{pycp_block.1} parent=0 // pred_check
    _
  $region31: #{pycp_block.1} parent=0 // pred_check_branch
    %222 = sbr.rel (0) target = $region33
  $region32: #{pycp_block.1} parent=0 // pred_region
    _
  $region33: #{pycp_block.1} parent=0 // pred_fallthru
    _
  // Predicated region
  $region34: #{pycp_block.1} parent=0 // pred_check
    _
  $region35: #{pycp_block.1} parent=0 // pred_check_branch
    %224 = sbr.rel (0) target = $region37
  $region36: #{pycp_block.1} parent=0 // pred_region
    _
  $region37: #{pycp_block.1} parent=0 // pred_fallthru
    _
  // Predicated region
  $region38: #{pycp_block.1} parent=0 // pred_check
    _
  $region39: #{pycp_block.1} parent=0 // pred_check_branch
    %226 = sbr.rel (0) target = $region41
  $region40: #{pycp_block.1} parent=0 // pred_region
    _
  $region41: #{pycp_block.1} parent=0 // pred_fallthru
    _

</llo_original>
